<compile_context>
chip_gen: v7x
topology: tpu7x:2x2x1
jax: 0.10.0
libtpu: 0.0.40
codegen_flags: <defaults>
</compile_context>

<pallas_src>
import functools

import jax
import jax.numpy as jnp
from jax.experimental import pallas as pl
from jax.experimental.pallas import tpu as pltpu

NUM_CLASSES = 3
_C_PAD = 8                       # pad class axis to one sublane tile
_LANE = 128
_NORM_EPS = 1e-12                # matches torch.nn.functional.normalize default eps


def _vmem_capacity_bytes():
    try:
        return int(pltpu.get_tpu_info().vmem_capacity_bytes)
    except Exception:            # conservative fallback (old jax / interpret mode)
        return 128 << 20


def _partial_sums_kernel(labels_ref, feat_ref, sums_ref, counts_ref,
                         sums_acc, counts_acc, *, rem):
    """Accumulate per-class feature sums / counts for one (D-slab, N-tile) grid point.

    labels_ref: (1, TN) int32        feat_ref: (TN, TD) native dtype
    sums_ref:   (_C_PAD, TD) f32     counts_ref: (1, _C_PAD, 128) int32
    sums_acc:   (_C_PAD, TD) f32     counts_acc: (_C_PAD, 128) int32
    """
    n_idx = pl.program_id(1)
    last_n = pl.num_programs(1) - 1

    @pl.when(n_idx == 0)
    def _init():
        sums_acc[...] = jnp.zeros_like(sums_acc)
        counts_acc[...] = jnp.zeros_like(counts_acc)

    def _accumulate(feats, labels):
        # (C_PAD, 1) class iota broadcast against (1, TN) labels -> (C_PAD, TN) membership;
        # keeps vreg pressure low vs a full (C_PAD, TN) iota.
        class_ids = jax.lax.broadcasted_iota(jnp.int32, (_C_PAD, 1), 0)
        member = class_ids == labels                       # (C_PAD, TN) bool
        onehot = member.astype(feats.dtype)
        # TODO(synk): on v7x with f32 features, confirm via bundle dump that the f32 MXU
        # weight stream keeps up with the 3.2 TB/s HBM rate; if not, switch to a bf16
        # one-hot matmul or a 3-accumulator VPU select-add path.
        sums_acc[...] += jnp.dot(onehot, feats, preferred_element_type=jnp.float32)
        # per-tile count in f32 (exact: tile_n <= 32768 << 2^24), accumulated exactly in i32
        tile_counts = jnp.sum(member.astype(jnp.float32), axis=1, keepdims=True)
        counts_acc[...] += tile_counts.astype(jnp.int32)

    if rem == 0:
        _accumulate(feat_ref[...], labels_ref[...])
    else:
        tile_n = feat_ref.shape[0]

        @pl.when(n_idx != last_n)
        def _full_tile():
            _accumulate(feat_ref[...], labels_ref[...])

        @pl.when(n_idx == last_n)
        def _ragged_tile():
            # Last N tile is ragged (features are NOT padded host-side): zero the tail
            # feature rows (0 * NaN = NaN, so exclusion via labels alone is not enough)
            # and force the tail labels to -1 so they never match a class.
            feats = feat_ref[...]
            labels = labels_ref[...]
            row_ok = jax.lax.broadcasted_iota(jnp.int32, (tile_n, 1), 0) < rem
            lane_ok = jax.lax.broadcasted_iota(jnp.int32, (1, tile_n), 1) < rem
            feats = jnp.where(row_ok, feats, jnp.zeros_like(feats))
            labels = jnp.where(lane_ok, labels, -1)
            _accumulate(feats, labels)

    @pl.when(n_idx == last_n)
    def _writeback():
        sums_ref[...] = sums_acc[...]
        counts_ref[...] = counts_acc[...].reshape(counts_ref.shape)


def centercompute_val(features, labels, *, feat_tile_bytes=None, split_d=None):
    """JAX/Pallas equivalent of the PyTorch forward.

    Args:
      features: (N, D) float array (kept in its native dtype, e.g. bf16 or f32).
      labels:   (N,) int array with values in {0, 1, 2}; each class must appear at least
                once (same requirement as the PyTorch module; a missing class yields
                inf/nan, mirroring the 0-count divide).
      feat_tile_bytes: optional override of the per-tile feature byte budget (testing).
      split_d: optional override of the D-slab split (None = auto: split on 2-TC parts).

    Returns:
      (fea_center, target): fea_center is (3, D) in features.dtype, target = [0, 1, 2].
    """
    n, d = features.shape
    itemsize = jnp.dtype(features.dtype).itemsize

    # --- generation-aware budgets -------------------------------------------------
    vmem_cap = _vmem_capacity_bytes()
    small_vmem = vmem_cap <= (64 << 20)          # v7x-class part (64 MiB VMEM, 2 TCs)
    if feat_tile_bytes is None:
        feat_tile_bytes = (6 << 20) if small_vmem else (12 << 20)
    vmem_limit_cap = (32 << 20) if small_vmem else (48 << 20)
    if split_d is None:
        split_d = small_vmem                     # 2 TensorCores -> shard the D axis

    # --- D tiling -------------------------------------------------------------------
    tile_d = d
    if split_d and d >= 256 and d % 256 == 0:
        tile_d = d // 2
    # VMEM fallback for very wide features: keep a 128-row double-buffered tile in budget.
    while tile_d % 256 == 0 and 2 * _LANE * tile_d * itemsize > feat_tile_bytes:
        tile_d //= 2
    # TODO(synk): very wide D that is not a multiple of 256 cannot be narrowed here and
    # would need a ragged-D variant; not needed at typical embedding widths.
    num_d_tiles = -(-d // tile_d)

    # --- N tiling (no feature padding; ragged last tile masked in-kernel) ------------
    if n < 2 * _LANE:
        tile_n, rem = n, 0                       # single full block (block dims == array dims)
    else:
        bytes_per_row = max(tile_d * itemsize, 1)
        tile_n = (feat_tile_bytes // bytes_per_row) // _LANE * _LANE
        tile_n = int(min(max(tile_n, _LANE), 32768))
        # keep >= 2 N steps so the BlockSpec pipeline overlaps DMA with the MXU
        tile_n = min(tile_n, max(_LANE, (n // 2) // _LANE * _LANE))
        rem = n % tile_n
    num_n_tiles = -(-n // tile_n)

    labels_2d = labels.astype(jnp.int32).reshape(1, n)

    # --- VMEM limit (double-buffered inputs/outputs + scratch), with headroom --------
    vmem_needed = (2 * tile_n * tile_d * itemsize        # features double-buffer
                   + 2 * tile_n * 4                      # labels double-buffer
                   + _C_PAD * tile_d * 4                 # sums accumulator
                   + _C_PAD * _LANE * 4                  # counts accumulator
                   + 2 * _C_PAD * tile_d * 4             # sums output buffers
                   + 2 * _C_PAD * _LANE * 4)             # counts output buffers
    vmem_limit = int(min(max(2 * vmem_needed, 16 << 20), vmem_limit_cap))

    kernel = functools.partial(_partial_sums_kernel, rem=rem)

    sums, counts = pl.pallas_call(
        kernel,
        out_shape=(
            jax.ShapeDtypeStruct((_C_PAD, d), jnp.float32),
            jax.ShapeDtypeStruct((num_d_tiles, _C_PAD, _LANE), jnp.int32),
        ),
        grid_spec=pltpu.PrefetchScalarGridSpec(
            num_scalar_prefetch=0,
            grid=(num_d_tiles, num_n_tiles),
            in_specs=[
                pl.BlockSpec((1, tile_n), lambda di, ni: (0, ni)),
                pl.BlockSpec((tile_n, tile_d), lambda di, ni: (ni, di)),
            ],
            out_specs=[
                pl.BlockSpec((_C_PAD, tile_d), lambda di, ni: (0, di)),
                pl.BlockSpec((1, _C_PAD, _LANE), lambda di, ni: (di, 0, 0)),
            ],
            scratch_shapes=[
                pltpu.VMEM((_C_PAD, tile_d), jnp.float32),
                pltpu.VMEM((_C_PAD, _LANE), jnp.int32),
            ],
        ),
        compiler_params=pltpu.CompilerParams(
            dimension_semantics=("parallel", "arbitrary"),
            vmem_limit_bytes=vmem_limit,
        ),
    )(labels_2d, features)

    # Finalize (divide + row-wise L2 normalize) in plain JAX: the (3, D) work is
    # negligible, and keeping it out of the kernel lets the D axis be sharded across
    # TensorCores (the norm needs the whole row).
    counts3 = counts[0, :NUM_CLASSES, 0].astype(jnp.float32)           # (3,)
    means = sums[:NUM_CLASSES, :] / counts3[:, None]                   # f32 (3, D)
    norms = jnp.sqrt(jnp.sum(means * means, axis=1, keepdims=True))
    fea_center = (means / jnp.maximum(norms, _NORM_EPS)).astype(features.dtype)

    target = jnp.array([0, 1, 2], dtype=jnp.int32)
    return fea_center, target


def _reference(features, labels):
    """Pure-JAX reference mirroring the PyTorch loop semantics."""
    feats = jnp.asarray(features, dtype=jnp.float32)
    labels = jnp.asarray(labels)
    centers = []
    for c in range(NUM_CLASSES):
        mask = labels == c
        cnt = jnp.sum(mask)
        s = jnp.sum(jnp.where(mask[:, None], feats, 0.0), axis=0)
        centers.append(s / cnt)
    fc = jnp.stack(centers, axis=0)
    norm = jnp.maximum(jnp.sqrt(jnp.sum(fc * fc, axis=1, keepdims=True)), _NORM_EPS)
    return fc / norm


if __name__ == "__main__":
    key = jax.random.PRNGKey(0)

    # --- small case (single tile, full blocks, no masking) ---------------------------
    N, D = 8, 32
    features = jax.random.normal(key, (N, D), dtype=jnp.float32)
    labels = jnp.array([0, 1, 2, 0, 1, 2, 0, 1], dtype=jnp.int32)

    fea_center, target = centercompute_val(features, labels)
    fea_center = jax.block_until_ready(fea_center)
    target = jax.block_until_ready(target)

    ref = _reference(features, labels)
    assert fea_center.shape == (NUM_CLASSES, D)
    assert jnp.allclose(fea_center.astype(jnp.float32), ref, atol=1e-5, rtol=1e-5), \
        "mismatch vs reference (small case)"
    assert jnp.array_equal(target, jnp.array([0, 1, 2], dtype=jnp.int32))

    # --- ragged multi-tile case (grid > 1, in-kernel tail masking, no feature pad) ---
    N2, D2 = 300, 128
    features2 = jax.random.normal(jax.random.PRNGKey(1), (N2, D2), dtype=jnp.float32)
    labels2 = (jnp.arange(N2) % NUM_CLASSES).astype(jnp.int32)

    fea_center2, _ = centercompute_val(features2, labels2,
                                       feat_tile_bytes=128 * D2 * 4)   # tile_n=128, 3 steps
    fea_center2 = jax.block_until_ready(fea_center2)
    ref2 = _reference(features2, labels2)
    assert jnp.allclose(fea_center2.astype(jnp.float32), ref2, atol=1e-5, rtol=1e-5), \
        "mismatch vs reference (ragged tiled case)"

    # --- 2D grid case: parallel D slabs + ragged N tiles ------------------------------
    N3, D3 = 300, 256
    features3 = jax.random.normal(jax.random.PRNGKey(2), (N3, D3), dtype=jnp.float32)
    labels3 = ((jnp.arange(N3) * 7) % NUM_CLASSES).astype(jnp.int32)

    fea_center3, _ = centercompute_val(features3, labels3, split_d=True,
                                       feat_tile_bytes=128 * 128 * 4)  # grid (2, 3)
    fea_center3 = jax.block_until_ready(fea_center3)
    ref3 = _reference(features3, labels3)
    assert jnp.allclose(fea_center3.astype(jnp.float32), ref3, atol=1e-5, rtol=1e-5), \
        "mismatch vs reference (D-split case)"

    # --- bf16 features (native-dtype path, f32 accumulation) -------------------------
    features4 = jax.random.normal(jax.random.PRNGKey(3), (N2, D2)).astype(jnp.bfloat16)
    fea_center4, _ = centercompute_val(features4, labels2)
    fea_center4 = jax.block_until_ready(fea_center4)
    ref4 = _reference(features4, labels2)
    assert fea_center4.dtype == jnp.bfloat16
    assert jnp.allclose(fea_center4.astype(jnp.float32), ref4, atol=1e-2, rtol=1e-2), \
        "mismatch vs reference (bf16 case)"

    print("KERNEL_OK")
</pallas_src>

<mosaic_0001>
module attributes {stable_mosaic.version = 11 : i64} {
  func.func @_partial_sums_kernel(%arg0: i32, %arg1: i32, %arg2: memref<1x8xi32, #tpu.memory_space<vmem>>, %arg3: memref<8x32xf32, #tpu.memory_space<vmem>>, %arg4: memref<8x32xf32, #tpu.memory_space<vmem>>, %arg5: memref<1x8x128xi32, #tpu.memory_space<vmem>>, %arg6: memref<8x32xf32, #tpu.memory_space<vmem>>, %arg7: memref<8x128xi32, #tpu.memory_space<vmem>>) attributes {dimension_semantics = [#tpu.dimension_semantics<parallel>, #tpu.dimension_semantics<arbitrary>], iteration_bounds = array<i64: 1, 1>, scalar_prefetch = 0 : i64, scratch_operands = 2 : i64, tpu.core_type = #tpu.core_type<tc>, window_params = [{transform_indices = @transform_0, window_bounds = array<i64: 1, 8>}, {transform_indices = @transform_1, window_bounds = array<i64: 8, 32>}, {transform_indices = @transform_2, window_bounds = array<i64: 8, 32>}, {transform_indices = @transform_3, window_bounds = array<i64: 1, 8, 128>}]} {
    %c0_i32 = arith.constant 0 : i32
    %0 = arith.cmpi eq, %arg1, %c0_i32 : i32
    %1 = arith.extui %0 : i1 to i32
    %c0_i32_0 = arith.constant 0 : i32
    %2 = arith.cmpi ne, %1, %c0_i32_0 : i32
    scf.if %2 {
      %cst_15 = arith.constant 0.000000e+00 : f32
      %27 = vector.broadcast %cst_15 : f32 to vector<8x32xf32>
      %c0_16 = arith.constant 0 : index
      %c0_17 = arith.constant 0 : index
      %28 = vector.load %arg6[%c0_16, %c0_17] : memref<8x32xf32, #tpu.memory_space<vmem>>, vector<8x32xf32>
      tpu.vector_store %arg6[%c0_16, %c0_17], %27 {strides = array<i32>} : memref<8x32xf32, #tpu.memory_space<vmem>>, vector<8x32xf32>,
      %c0_i32_18 = arith.constant 0 : i32
      %29 = vector.broadcast %c0_i32_18 : i32 to vector<8x128xi32>
      %c0_19 = arith.constant 0 : index
      %c0_20 = arith.constant 0 : index
      %30 = vector.load %arg7[%c0_19, %c0_20] : memref<8x128xi32, #tpu.memory_space<vmem>>, vector<8x128xi32>
      tpu.vector_store %arg7[%c0_19, %c0_20], %29 {strides = array<i32>} : memref<8x128xi32, #tpu.memory_space<vmem>>, vector<8x128xi32>,
    } else {
    }
    %c0 = arith.constant 0 : index
    %c0_1 = arith.constant 0 : index
    %3 = vector.load %arg3[%c0, %c0_1] : memref<8x32xf32, #tpu.memory_space<vmem>>, vector<8x32xf32>
    %c0_2 = arith.constant 0 : index
    %c0_3 = arith.constant 0 : index
    %4 = vector.load %arg2[%c0_2, %c0_3] : memref<1x8xi32, #tpu.memory_space<vmem>>, vector<1x8xi32>
    %5 = tpu.iota {dimensions = array<i32: 0>} : vector<8x1xi32>
    %6 = vector.broadcast %5 : vector<8x1xi32> to vector<8x8xi32>
    %7 = vector.broadcast %4 : vector<1x8xi32> to vector<8x8xi32>
    %8 = arith.cmpi eq, %6, %7 : vector<8x8xi32>
    %9 = arith.extui %8 : vector<8x8xi1> to vector<8x8xi32>
    %10 = arith.sitofp %9 : vector<8x8xi32> to vector<8x8xf32>
    %c0_4 = arith.constant 0 : index
    %c0_5 = arith.constant 0 : index
    %11 = vector.load %arg6[%c0_4, %c0_5] : memref<8x32xf32, #tpu.memory_space<vmem>>, vector<8x32xf32>
    %cst = arith.constant dense<0.000000e+00> : vector<8x32xf32>
    %12 = tpu.matmul %10, %3, %cst {dimension_numbers = #tpu.dot_dimension_numbers<[1], [0], [0], [1], [0, 0, 1, 1], [], []>} : vector<8x8xf32>, vector<8x32xf32>, vector<8x32xf32> -> vector<8x32xf32>
    %13 = arith.addf %11, %12 : vector<8x32xf32>
    %c0_6 = arith.constant 0 : index
    %c0_7 = arith.constant 0 : index
    %14 = vector.load %arg6[%c0_6, %c0_7] : memref<8x32xf32, #tpu.memory_space<vmem>>, vector<8x32xf32>
    tpu.vector_store %arg6[%c0_6, %c0_7], %13 {strides = array<i32>} : memref<8x32xf32, #tpu.memory_space<vmem>>, vector<8x32xf32>,
    %15 = arith.extui %8 : vector<8x8xi1> to vector<8x8xi32>
    %16 = arith.sitofp %15 : vector<8x8xi32> to vector<8x8xf32>
    %cst_8 = arith.constant dense<0.000000e+00> : vector<8xf32>
    %17 = vector.multi_reduction <add>, %16, %cst_8 [1] : vector<8x8xf32> to vector<8xf32>
    %18 = vector.shape_cast %17 : vector<8xf32> to vector<8x1xf32>
    %c0_9 = arith.constant 0 : index
    %c0_10 = arith.constant 0 : index
    %19 = vector.load %arg7[%c0_9, %c0_10] : memref<8x128xi32, #tpu.memory_space<vmem>>, vector<8x128xi32>
    %20 = arith.fptosi %18 : vector<8x1xf32> to vector<8x1xi32>
    %21 = vector.broadcast %20 : vector<8x1xi32> to vector<8x128xi32>
    %22 = arith.addi %19, %21 : vector<8x128xi32>
    %c0_11 = arith.constant 0 : index
    %c0_12 = arith.constant 0 : index
    %23 = vector.load %arg7[%c0_11, %c0_12] : memref<8x128xi32, #tpu.memory_space<vmem>>, vector<8x128xi32>
    tpu.vector_store %arg7[%c0_11, %c0_12], %22 {strides = array<i32>} : memref<8x128xi32, #tpu.memory_space<vmem>>, vector<8x128xi32>,
    %c0_i32_13 = arith.constant 0 : i32
    %24 = arith.cmpi eq, %arg1, %c0_i32_13 : i32
    %25 = arith.extui %24 : i1 to i32
    %c0_i32_14 = arith.constant 0 : i32
    %26 = arith.cmpi ne, %25, %c0_i32_14 : i32
    scf.if %26 {
      %c0_15 = arith.constant 0 : index
      %c0_16 = arith.constant 0 : index
      %27 = vector.load %arg6[%c0_15, %c0_16] : memref<8x32xf32, #tpu.memory_space<vmem>>, vector<8x32xf32>
      %c0_17 = arith.constant 0 : index
      %c0_18 = arith.constant 0 : index
      %28 = vector.load %arg4[%c0_17, %c0_18] : memref<8x32xf32, #tpu.memory_space<vmem>>, vector<8x32xf32>
      tpu.vector_store %arg4[%c0_17, %c0_18], %27 {strides = array<i32>} : memref<8x32xf32, #tpu.memory_space<vmem>>, vector<8x32xf32>,
      %c0_19 = arith.constant 0 : index
      %c0_20 = arith.constant 0 : index
      %29 = vector.load %arg7[%c0_19, %c0_20] : memref<8x128xi32, #tpu.memory_space<vmem>>, vector<8x128xi32>
      %30 = vector.shape_cast %29 : vector<8x128xi32> to vector<1x8x128xi32>
      %c0_21 = arith.constant 0 : index
      %c0_22 = arith.constant 0 : index
      %c0_23 = arith.constant 0 : index
      %31 = vector.load %arg5[%c0_21, %c0_22, %c0_23] : memref<1x8x128xi32, #tpu.memory_space<vmem>>, vector<1x8x128xi32>
      tpu.vector_store %arg5[%c0_21, %c0_22, %c0_23], %30 {strides = array<i32>} : memref<1x8x128xi32, #tpu.memory_space<vmem>>, vector<1x8x128xi32>,
    } else {
    }
    return
  }
  func.func @transform_0(%arg0: i32, %arg1: i32) -> (i32, i32) {
    %c0_i32 = arith.constant 0 : i32
    %c0_i32_0 = arith.constant 0 : i32
    return %c0_i32, %arg1 : i32, i32
  }
  func.func @transform_1(%arg0: i32, %arg1: i32) -> (i32, i32) {
    %c0_i32 = arith.constant 0 : i32
    return %arg1, %arg0 : i32, i32
  }
  func.func @transform_2(%arg0: i32, %arg1: i32) -> (i32, i32) {
    %c0_i32 = arith.constant 0 : i32
    %c0_i32_0 = arith.constant 0 : i32
    return %c0_i32, %arg0 : i32, i32
  }
  func.func @transform_3(%arg0: i32, %arg1: i32) -> (i32, i32, i32) {
    %c0_i32 = arith.constant 0 : i32
    %c0_i32_0 = arith.constant 0 : i32
    %c0_i32_1 = arith.constant 0 : i32
    return %arg0, %c0_i32, %c0_i32_0 : i32, i32, i32
  }
}

</mosaic_0001>

<llo_original>
// kernel: tpu_custom_call.1
$region0: #{tpu_custom_call.1}
  #allocation0 [shape = 'u32[]', space=smem, size = 0x4, offset = 0x4, fixed_abs, tag = 'smem constant byte address 0x4 - core index']
  #allocation1 [shape = 'u32[144,128]{1,0:T(1,128)}', space=vmem, size = 0x12000, scoped, tag = 'internal scratch']
  #allocation2 [shape = 'f32[8,32]{1,0:T(8,128)}', space=vmem, size = 0x1000, scoped, tag = 'scratch operand']
  #allocation3 [shape = 's32[8,128]{1,0:T(8,128)}', space=vmem, size = 0x1000, scoped, tag = 'scratch operand']
  %s0 = inlined_call_operand.hbm [shape: s32[1,8], index: 0, kind: input, shape index: {}]
  %s1 = inlined_call_operand.hbm [shape: f32[8,32], index: 1, kind: input, shape index: {}]
  %s2 = inlined_call_operand.hbm [shape: f32[8,32], index: 2, kind: output, shape index: {0}]
  %s3 = inlined_call_operand.hbm [shape: s32[1,8,128], index: 3, kind: output, shape index: {1}]
  %4 = xla_tuple %s2, %s3
  %s5 = sld [smem:[#allocation0]]
  $region42: #{tpu_custom_call.1} parent=0
    _
  %s7 = ssub.s32 1, %s5
  %s8 = scalar_select 0, %s7, %s5
  $region1: #{tpu_custom_call.1} parent=0
    #allocation4 [shape = 'u8[512]{0}', space=vmem, size = 0x400, scoped, tag = 'input window, operand 0, single buffered']
    #allocation5 [shape = 's32[1]{0}', space=sflag, size = 0x4, scoped, tag = 'scoped memory for tpu_custom_call.1']
    #allocation6 [shape = 's32[1]{0}', space=sflag, size = 0x4, scoped, tag = 'scoped memory for tpu_custom_call.1']
    #allocation7 [shape = 'u8[4096]{0}', space=vmem, size = 0x1000, scoped, tag = 'input window, operand 1, single buffered']
    #allocation8 [shape = 's32[1]{0}', space=sflag, size = 0x4, scoped, tag = 'scoped memory for tpu_custom_call.1']
    #allocation9 [shape = 'u8[4096]{0}', space=vmem, size = 0x1000, scoped, tag = 'output window, operand 0, single buffered']
    #allocation10 [shape = 'u8[4096]{0}', space=vmem, size = 0x1000, scoped, tag = 'output window, operand 1, single buffered']
    #allocation11 [shape = 's32[1]{0}', space=sflag, size = 0x4, scoped, tag = 'scoped memory for tpu_custom_call.1']
    %9 = vsyncpa [#allocation5], 0
    %10 = vsyncpa [#allocation8], 0
    %11 = vsyncpa [#allocation6], 0
    %12 = vsyncpa [#allocation11], 0
    // Predicated region
    $region2: #{tpu_custom_call.1} parent=1 // pred_check
      _
    $region3: #{tpu_custom_call.1} parent=1 // pred_check_branch
      %14 = sbr.rel (0) target = $region5
    $region4: #{tpu_custom_call.1} parent=1 // pred_region
      %s16 = ssub.s32 16, 16
      %17 = vsyncadd [#allocation5], %s16
      %s19 = sshll.u32 [#allocation4], 4
      %s20 = int_to_ptr.vmem [resolvable:$true] %s19
      %22 = dma.hbm_to_vmem [thread:$0]  %s0, 16, %s20, [#allocation5]
    $region5: #{tpu_custom_call.1} parent=1 // pred_fallthru
      _
    // Predicated region
    $region6: #{tpu_custom_call.1} parent=1 // pred_check
      _
    $region7: #{tpu_custom_call.1} parent=1 // pred_check_branch
      %24 = sbr.rel (0) target = $region9
    $region8: #{tpu_custom_call.1} parent=1 // pred_region
      %s26 = ssub.s32 128, 128
      %27 = vsyncadd [#allocation8], %s26
      %s29 = sshll.u32 [#allocation7], 4
      %s30 = int_to_ptr.vmem [resolvable:$true] %s29
      %32 = dma.hbm_to_vmem [thread:$0]  %s1, 128, %s30, [#allocation8]
    $region9: #{tpu_custom_call.1} parent=1 // pred_fallthru
      _
    // Predicated region
    $region10: #{tpu_custom_call.1} parent=1 // pred_check
      _
    $region11: #{tpu_custom_call.1} parent=1 // pred_check_branch
      %34 = sbr.rel (0) target = $region13
    $region12: #{tpu_custom_call.1} parent=1 // pred_region
      %35 = dma.done [#allocation5], 16
    $region13: #{tpu_custom_call.1} parent=1 // pred_fallthru
      _
    // Predicated region
    $region14: #{tpu_custom_call.1} parent=1 // pred_check
      _
    $region15: #{tpu_custom_call.1} parent=1 // pred_check_branch
      %37 = sbr.rel (0) target = $region17
    $region16: #{tpu_custom_call.1} parent=1 // pred_region
      %38 = dma.done [#allocation8], 128
    $region17: #{tpu_custom_call.1} parent=1 // pred_fallthru
      _
    %p39 = scmp.eq.s32.totalorder 0, 0
    // Predicated region
    $region18: #{tpu_custom_call.1} parent=1 // pred_check
      %p40 = pneg %p39
    $region19: #{tpu_custom_call.1} parent=1 // pred_check_branch
      %42 = sbr.rel (%p40) target = $region21
    $region20: #{tpu_custom_call.1} parent=1 // pred_region
      %vm43 = vcmask 261120
      %44 = vst.msk [vmem:[#allocation2] sm:$0xff] %vm43, 0.0
      %45 = vst [vmem:[#allocation3] sm:$0xff] 0
    $region21: #{tpu_custom_call.1} parent=1 // pred_fallthru
      _
    %v46 = vld [vmem:[#allocation7] sm:$0xff]
    %v47 = vld [vmem:[#allocation4] sm:$0x1]
    %v48 = vlaneseq
    %v49 = vshrl.u32 %v48, 7
    %v50 = vlaneseq
    %v51 = vshrl.u32 %v50, 7
    %v52 = vsub.s32 0, %v51
    %v53 = vrot.slane %v47, %v52
    %vm54 = vcmp.eq.s32.totalorder %v49, %v53
    %v55 = vsel %vm54, 1, 0
    %v56 = vcvt.s32.f32 %v55
    %v57 = vld [vmem:[#allocation2] sm:$0xff]
    %vm58 = vcmask 64512
    %v60 = vsel %vm58, %v56, 0
    %62 = vmatprep.subr.mxu0 0.0
    %63 = vmatpush1.msra.mxu0 %v46
    %64 = vmatprep.subr.mxu0 0.0
    %65 = vmatpush1.msra.mxu0 0.0
    %66 = vmatprep.subr.mxu0 0.0
    %67 = vmatpush1.msra.mxu0 0.0
    %68 = vmatprep.subr.mxu0 0.0
    %69 = vmatpush1.msra.mxu0 0.0
    %70 = vmatprep.subr.mxu0 0.0
    %71 = vmatpush1.msra.mxu0 0.0
    %72 = vmatprep.subr.mxu0 0.0
    %73 = vmatpush1.msra.mxu0 0.0
    %74 = vmatprep.subr.mxu0 0.0
    %75 = vmatpush1.msra.mxu0 0.0
    %76 = vmatprep.subr.mxu0 0.0
    %77 = vmatpush1.msra.mxu0 0.0
    %78 = vmatprep.subr.mxu0 0.0
    %79 = vmatpush1.msra.mxu0 0.0
    %80 = vmatprep.subr.mxu0 0.0
    %81 = vmatpush1.msra.mxu0 0.0
    %82 = vmatprep.subr.mxu0 0.0
    %83 = vmatpush1.msra.mxu0 0.0
    %84 = vmatprep.subr.mxu0 0.0
    %85 = vmatpush1.msra.mxu0 0.0
    %86 = vmatprep.subr.mxu0 0.0
    %87 = vmatpush1.msra.mxu0 0.0
    %88 = vmatprep.subr.mxu0 0.0
    %89 = vmatpush1.msra.mxu0 0.0
    %90 = vmatprep.subr.mxu0 0.0
    %91 = vmatpush1.msra.mxu0 0.0
    %92 = vmatprep.subr.mxu0 0.0
    %93 = vmatpush1.msra.mxu0 0.0
    %94 = vmatprep.subr.mxu0 0.0
    %95 = vmatpush1.msra.mxu0 0.0
    %96 = vmatprep.subr.mxu0 0.0
    %97 = vmatpush1.msra.mxu0 0.0
    %98 = vmatprep.subr.mxu0 0.0
    %99 = vmatpush1.msra.mxu0 0.0
    %100 = vmatprep.subr.mxu0 0.0
    %101 = vmatpush1.msra.mxu0 0.0
    %102 = vmatprep.subr.mxu0 0.0
    %103 = vmatpush1.msra.mxu0 0.0
    %104 = vmatprep.subr.mxu0 0.0
    %105 = vmatpush1.msra.mxu0 0.0
    %106 = vmatprep.subr.mxu0 0.0
    %107 = vmatpush1.msra.mxu0 0.0
    %108 = vmatprep.subr.mxu0 0.0
    %109 = vmatpush1.msra.mxu0 0.0
    %110 = vmatprep.subr.mxu0 0.0
    %111 = vmatpush1.msra.mxu0 0.0
    %112 = vmatprep.subr.mxu0 0.0
    %113 = vmatpush1.msra.mxu0 0.0
    %114 = vmatprep.subr.mxu0 0.0
    %115 = vmatpush1.msra.mxu0 0.0
    %116 = vmatprep.subr.mxu0 0.0
    %117 = vmatpush1.msra.mxu0 0.0
    %118 = vmatprep.subr.mxu0 0.0
    %119 = vmatpush1.msra.mxu0 0.0
    %120 = vmatprep.subr.mxu0 0.0
    %121 = vmatpush1.msra.mxu0 0.0
    %122 = vmatprep.subr.mxu0 0.0
    %123 = vmatpush1.msra.mxu0 0.0
    %124 = vmatprep.subr.mxu0 0.0
    %125 = vmatpush1.msra.mxu0 0.0
    %126 = vmatprep.mubr.f32.mxu0 0.0
    %127 = vmatmul.mubr.f32.gmra.mrb[0].mxu0 %v60
    %v128 = vpop.f32.mrb[0].mxu0
    %v129 = vadd.f32 0.0, %v128
    %v130 = vpop.f32.mrb[0].mxu0
    %131 = vdwg.mxu0
    %v132 = vadd.f32 %v57, %v129
    %vm133 = vcmask 261120
    %134 = vst.msk [vmem:[#allocation2] sm:$0xff] %vm133, %v132
    %v135 = vsel %vm58, %v56, 0.0
    %136 = vadd.xlane.f32.xlu0 %v135
    %v137 = vpop.xlane.xlu0 %136
    %v138 = vld [vmem:[#allocation3] sm:$0xff]
    %v139 = vcvt.f32.s32.to.zero.pseudo %v137
    %v140 = vadd.s32 %v138, %v139
    %141 = vst [vmem:[#allocation3] sm:$0xff] %v140
    // Predicated region
    $region22: #{tpu_custom_call.1} parent=1 // pred_check
      %p142 = pneg %p39
    $region23: #{tpu_custom_call.1} parent=1 // pred_check_branch
      %144 = sbr.rel (%p142) target = $region25
    $region24: #{tpu_custom_call.1} parent=1 // pred_region
      %v145 = vld [vmem:[#allocation2] sm:$0xff]
      %146 = vst.msk [vmem:[#allocation9] sm:$0xff] %vm133, %v145
      %v147 = vld [vmem:[#allocation3] sm:$0xff]
      %148 = vst [vmem:[#allocation10] sm:$0xff] %v147
    $region25: #{tpu_custom_call.1} parent=1 // pred_fallthru
      _
    // Predicated region
    $region26: #{tpu_custom_call.1} parent=1 // pred_check
      _
    $region27: #{tpu_custom_call.1} parent=1 // pred_check_branch
      %150 = sbr.rel (0) target = $region29
    $region28: #{tpu_custom_call.1} parent=1 // pred_region
      %s152 = ssub.s32 128, 128
      %153 = vsyncadd [#allocation6], %s152
      %s155 = sshll.u32 [#allocation9], 4
      %s156 = int_to_ptr.vmem [resolvable:$true] %s155
      %158 = dma.vmem_to_hbm [thread:$0]  %s156, 128, %s2, [#allocation6]
    $region29: #{tpu_custom_call.1} parent=1 // pred_fallthru
      _
    // Predicated region
    $region30: #{tpu_custom_call.1} parent=1 // pred_check
      _
    $region31: #{tpu_custom_call.1} parent=1 // pred_check_branch
      %160 = sbr.rel (0) target = $region33
    $region32: #{tpu_custom_call.1} parent=1 // pred_region
      %s162 = ssub.s32 128, 128
      %163 = vsyncadd [#allocation11], %s162
      %s165 = sshll.u32 [#allocation10], 4
      %s166 = int_to_ptr.vmem [resolvable:$true] %s165
      %168 = dma.vmem_to_hbm [thread:$0]  %s166, 128, %s3, [#allocation11]
    $region33: #{tpu_custom_call.1} parent=1 // pred_fallthru
      _
    // Predicated region
    $region34: #{tpu_custom_call.1} parent=1 // pred_check
      _
    $region35: #{tpu_custom_call.1} parent=1 // pred_check_branch
      %170 = sbr.rel (0) target = $region37
    $region36: #{tpu_custom_call.1} parent=1 // pred_region
      %171 = dma.done [#allocation6], 128
    $region37: #{tpu_custom_call.1} parent=1 // pred_fallthru
      _
    // Predicated region
    $region38: #{tpu_custom_call.1} parent=1 // pred_check
      _
    $region39: #{tpu_custom_call.1} parent=1 // pred_check_branch
      %173 = sbr.rel (0) target = $region41
    $region40: #{tpu_custom_call.1} parent=1 // pred_region
      %174 = dma.done [#allocation11], 128
    $region41: #{tpu_custom_call.1} parent=1 // pred_fallthru
      _
    %175 = vsyncpa [#allocation5], 1
    %176 = vsyncpa [#allocation8], 1
    %177 = vsyncpa [#allocation6], 1
    %178 = vsyncpa [#allocation11], 1

</llo_original>
